<compile_context>
chip_gen: v7x
topology: tpu7x:2x2x1
jax: 0.10.0
libtpu: 0.0.40
codegen_flags: <defaults>
</compile_context>

<pallas_src>
import functools

import jax
import jax.numpy as jnp
from jax import lax
from jax.experimental import pallas as pl
from jax.experimental.pallas import tpu as pltpu


# ---------------------------------------------------------------------------
# helpers
# ---------------------------------------------------------------------------
def _round_up(x, m):
    return ((x + m - 1) // m) * m


def _pick_lane_tile(total, max_tile):
    """Largest divisor of `total` <= max_tile that is a multiple of 128."""
    cap = min(max_tile, total)
    cand = cap - cap % 128
    while cand >= 128:
        if total % cand == 0:
            return cand
        cand -= 128
    # TODO(synk): pad `total` to a multiple of 128 instead of the full-extent
    # fallback for pathological sizes (review: _pick_tile hardening).
    return total


def _pick_row_tile(total, max_tile):
    """Largest divisor of `total` <= max_tile that is a multiple of 8."""
    cap = min(max_tile, total)
    cand = cap - cap % 8
    while cand >= 8:
        if total % cand == 0:
            return cand
        cand -= 8
    return total


# ---------------------------------------------------------------------------
# Kernel 1: conv 1x1 batch statistics (per-step partial sum / sum-of-squares).
# ---------------------------------------------------------------------------
def _conv1_stats_kernel(x_ref, s_ref, w1a_ref, w1b_ref, sum_ref, sq_ref):
    # conv 1x1 in f32 (K is tiny; keeps the BN1 statistics un-quantized).
    h = (jnp.dot(w1a_ref[...], x_ref[...], preferred_element_type=jnp.float32)
         + jnp.dot(w1b_ref[...], s_ref[...], preferred_element_type=jnp.float32))
    sum_ref[...] = jnp.sum(h, axis=1, keepdims=True)
    sq_ref[...] = jnp.sum(h * h, axis=1, keepdims=True)


# ---------------------------------------------------------------------------
# Kernel 2: conv1 + folded BN1 + ReLU + fused im2col 3x3 conv + BN2 partial
#           statistics.  One image per grid step, pixels on lanes.
# ---------------------------------------------------------------------------
def _conv2_kernel(x_ref, s_ref, w1a_ref, w1b_ref, p1_ref, cmask_ref, w2_ref,
                  h2_ref, s2_ref, ss2_ref,
                  apad_ref, g_ref, *, W, HW, C1r, DATA_OFF, LA):
    # ---- conv1 (f32) + folded BN1 affine + ReLU -> bf16 activation (C1r, HW) --
    h1 = (jnp.dot(w1a_ref[...], x_ref[...], preferred_element_type=jnp.float32)
          + jnp.dot(w1b_ref[...], s_ref[...], preferred_element_type=jnp.float32))
    p1 = p1_ref[...]
    a = jnp.maximum(h1 * p1[:, 0:1] + p1[:, 1:2], 0.0).astype(jnp.bfloat16)

    # ---- zero-guarded copy along lanes; the data store is 128-lane aligned ----
    # Zero guards are rewritten every step (no cross-step scratch invariant, so
    # the grid axis can stay "parallel").
    apad_ref[:, :DATA_OFF] = jnp.zeros((C1r, DATA_OFF), jnp.bfloat16)
    apad_ref[:, DATA_OFF:DATA_OFF + HW] = a
    apad_ref[:, DATA_OFF + HW:] = jnp.zeros((C1r, LA - DATA_OFF - HW),
                                            jnp.bfloat16)

    # ---- im2col: 9 constant-offset taps -> (9*C1r, HW), sublane-aligned stores
    lmask = cmask_ref[0:1, :]   # 0 where x == 0     (kills dx==0 row wrap-around)
    rmask = cmask_ref[1:2, :]   # 0 where x == W-1   (kills dx==2 row wrap-around)
    for dy in range(3):
        for dx in range(3):
            t = dy * 3 + dx
            start = DATA_OFF + (dy - 1) * W + (dx - 1)
            tap = apad_ref[:, start:start + HW]
            if dx == 0:
                tap = tap * lmask
            elif dx == 2:
                tap = tap * rmask
            g_ref[t * C1r:(t + 1) * C1r, :] = tap

    # ---- one fused K = 9*C1r matmul on the MXU, f32 accumulation --------------
    h2 = jnp.dot(w2_ref[...], g_ref[...], preferred_element_type=jnp.float32)
    h2_ref[...] = h2.astype(jnp.bfloat16)          # lane-dense bf16 intermediate
    s2_ref[...] = jnp.sum(h2, axis=1, keepdims=True)
    ss2_ref[...] = jnp.sum(h2 * h2, axis=1, keepdims=True)


# ---------------------------------------------------------------------------
# Kernel 3: BN2 affine + ReLU, lane-dense tiles, per-row (= per n,c) affine.
# ---------------------------------------------------------------------------
def _bn_relu_kernel(x_ref, p_ref, o_ref):
    p = p_ref[...]
    o_ref[...] = jnp.maximum(
        x_ref[...].astype(jnp.float32) * p[:, 0:1] + p[:, 1:2], 0.0)


# ---------------------------------------------------------------------------
# Wrapper
# ---------------------------------------------------------------------------
def double_conv_with_second_input(x, second, params, eps=1e-5, *,
                                  stats_tile_lanes=32768,
                                  out_tile_lanes=32768,
                                  out_tile_rows=256):
    """x: (N, C1, H, W) NCHW; second: (N, C2, H, W). Returns (N, Cout, H, W)."""
    N, C1, H, W = x.shape
    C2 = second.shape[1]
    Cout = params["w2"].shape[0]
    HW = H * W
    cnt = float(N * HW)

    # bf16 im2col packing stays tile-aligned when conv1's output channels are
    # padded to a multiple of 16 (one packed bf16 sublane tile).
    C1r = _round_up(C1, 16)
    DATA_OFF = _round_up(W + 1, 128)
    LA = DATA_OFF + HW + DATA_OFF

    # NCHW -> (N, C, H*W) are pure views; no transposes or channel concat.
    x3 = x.reshape(N, C1, HW)
    s3 = second.reshape(N, C2, HW)

    # conv1 weight split across the two inputs (replaces the channel concat);
    # output channels zero-padded to C1r.  Conv biases b1/b2 cancel exactly
    # through train-mode BatchNorm and are intentionally unused.
    w1 = params["w1"][:, :, 0, 0]                               # (C1, C1+C2)
    w1a = jnp.zeros((C1r, C1), jnp.float32).at[:C1].set(w1[:, :C1])
    w1b = jnp.zeros((C1r, C2), jnp.float32).at[:C1].set(w1[:, C1:])

    # 3x3 conv weight -> (Cout, 9*C1r), tap-major, bf16 for the MXU.
    w2t = jnp.transpose(params["w2"], (0, 2, 3, 1))             # (Cout, 3, 3, C1)
    w2t = jnp.pad(w2t, ((0, 0), (0, 0), (0, 0), (0, C1r - C1)))
    w2mat = w2t.reshape(Cout, 9 * C1r).astype(jnp.bfloat16)

    # Precomputed column-boundary masks (no per-step integer divide in-kernel).
    xs = jnp.arange(HW, dtype=jnp.int32) % W
    cmask = jnp.stack([(xs != 0), (xs != W - 1)]).astype(jnp.bfloat16)  # (2, HW)

    # ---------------- pass 1: conv1 batch statistics ----------------------------
    tp = _pick_lane_tile(HW, stats_tile_lanes)
    nt = HW // tp
    s1p, ss1p = pl.pallas_call(
        _conv1_stats_kernel,
        out_shape=(jax.ShapeDtypeStruct((N * nt, C1r, 1), jnp.float32),
                   jax.ShapeDtypeStruct((N * nt, C1r, 1), jnp.float32)),
        grid=(N, nt),
        in_specs=[pl.BlockSpec((None, C1, tp), lambda n, t: (n, 0, t)),
                  pl.BlockSpec((None, C2, tp), lambda n, t: (n, 0, t)),
                  pl.BlockSpec((C1r, C1), lambda n, t: (0, 0)),
                  pl.BlockSpec((C1r, C2), lambda n, t: (0, 0))],
        out_specs=(pl.BlockSpec((None, C1r, 1), lambda n, t: (n * nt + t, 0, 0)),
                   pl.BlockSpec((None, C1r, 1), lambda n, t: (n * nt + t, 0, 0))),
        compiler_params=pltpu.CompilerParams(
            dimension_semantics=("parallel", "parallel")),
    )(x3, s3, w1a, w1b)

    s1 = jnp.sum(s1p, axis=0)[:C1, 0]
    ss1 = jnp.sum(ss1p, axis=0)[:C1, 0]
    m1 = s1 / cnt
    v1 = ss1 / cnt - m1 * m1                         # biased batch variance
    a1 = params["g1"] * lax.rsqrt(v1 + eps)
    b1f = params["be1"] - m1 * a1
    p1 = (jnp.zeros((C1r, 2), jnp.float32)
          .at[:C1, 0].set(a1).at[:C1, 1].set(b1f))   # padded rows: 0 -> ReLU(0)=0

    # ---------------- pass 2: conv1 + BN1 + ReLU + fused 3x3 conv + BN2 stats ---
    k2 = functools.partial(_conv2_kernel, W=W, HW=HW, C1r=C1r,
                           DATA_OFF=DATA_OFF, LA=LA)
    h2, s2p, ss2p = pl.pallas_call(
        k2,
        out_shape=(jax.ShapeDtypeStruct((N, Cout, HW), jnp.bfloat16),
                   jax.ShapeDtypeStruct((N, Cout, 1), jnp.float32),
                   jax.ShapeDtypeStruct((N, Cout, 1), jnp.float32)),
        grid=(N,),
        in_specs=[pl.BlockSpec((None, C1, HW), lambda n: (n, 0, 0)),
                  pl.BlockSpec((None, C2, HW), lambda n: (n, 0, 0)),
                  pl.BlockSpec((C1r, C1), lambda n: (0, 0)),
                  pl.BlockSpec((C1r, C2), lambda n: (0, 0)),
                  pl.BlockSpec((C1r, 2), lambda n: (0, 0)),
                  pl.BlockSpec((2, HW), lambda n: (0, 0)),
                  pl.BlockSpec((Cout, 9 * C1r), lambda n: (0, 0))],
        out_specs=(pl.BlockSpec((None, Cout, HW), lambda n: (n, 0, 0)),
                   pl.BlockSpec((None, Cout, 1), lambda n: (n, 0, 0)),
                   pl.BlockSpec((None, Cout, 1), lambda n: (n, 0, 0))),
        scratch_shapes=[pltpu.VMEM((C1r, LA), jnp.bfloat16),
                        pltpu.VMEM((9 * C1r, HW), jnp.bfloat16)],
        compiler_params=pltpu.CompilerParams(
            dimension_semantics=("parallel",)),
    )(x3, s3, w1a, w1b, p1, cmask, w2mat)

    m2 = jnp.sum(s2p, axis=0)[:, 0] / cnt
    v2 = jnp.sum(ss2p, axis=0)[:, 0] / cnt - m2 * m2
    a2 = params["g2"] * lax.rsqrt(v2 + eps)
    b2f = params["be2"] - m2 * a2

    # ---------------- pass 3: BN2 affine + ReLU, lane-dense, output is NCHW -----
    rows = N * Cout
    h2v = h2.reshape(rows, HW)                                    # view, no copy
    p2 = jnp.stack([jnp.tile(a2, N), jnp.tile(b2f, N)], axis=1)   # (rows, 2)
    tr = _pick_row_tile(rows, out_tile_rows)
    tc = _pick_lane_tile(HW, out_tile_lanes)
    out_flat = pl.pallas_call(
        _bn_relu_kernel,
        out_shape=jax.ShapeDtypeStruct((rows, HW), jnp.float32),
        grid=(rows // tr, HW // tc),
        in_specs=[pl.BlockSpec((tr, tc), lambda i, j: (i, j)),
                  pl.BlockSpec((tr, 2), lambda i, j: (i, 0))],
        out_specs=pl.BlockSpec((tr, tc), lambda i, j: (i, j)),
        compiler_params=pltpu.CompilerParams(
            dimension_semantics=("parallel", "parallel")),
    )(h2v, p2)

    # (N*Cout, H*W) -> (N, Cout, H, W) is a pure view: already NCHW, no transpose.
    return out_flat.reshape(N, Cout, H, W)


# ---------------------------------------------------------------------------
# Pure-JAX reference mirroring the PyTorch module (train-mode BatchNorm).
# ---------------------------------------------------------------------------
def _reference_forward(x, second, params, eps=1e-5):
    xcat = jnp.concatenate([x, second], axis=1)
    h = lax.conv_general_dilated(
        xcat, params["w1"], (1, 1), "VALID",
        dimension_numbers=("NCHW", "OIHW", "NCHW")) + params["b1"][None, :, None, None]
    m1 = h.mean(axis=(0, 2, 3), keepdims=True)
    v1 = jnp.mean((h - m1) ** 2, axis=(0, 2, 3), keepdims=True)
    h = (h - m1) * lax.rsqrt(v1 + eps) * params["g1"][None, :, None, None] \
        + params["be1"][None, :, None, None]
    h = jnp.maximum(h, 0.0)
    h2 = lax.conv_general_dilated(
        h, params["w2"], (1, 1), ((1, 1), (1, 1)),
        dimension_numbers=("NCHW", "OIHW", "NCHW")) + params["b2"][None, :, None, None]
    m2 = h2.mean(axis=(0, 2, 3), keepdims=True)
    v2 = jnp.mean((h2 - m2) ** 2, axis=(0, 2, 3), keepdims=True)
    h2 = (h2 - m2) * lax.rsqrt(v2 + eps) * params["g2"][None, :, None, None] \
        + params["be2"][None, :, None, None]
    return jnp.maximum(h2, 0.0)


# ---------------------------------------------------------------------------
# Test harness
# ---------------------------------------------------------------------------
def _run_case(key, *, N, C1, C2, Cout, H, W, **tile_kwargs):
    ks = jax.random.split(key, 10)
    x = jax.random.normal(ks[0], (N, C1, H, W), jnp.float32)
    second = jax.random.normal(ks[1], (N, C2, H, W), jnp.float32)
    params = {
        "w1": 0.2 * jax.random.normal(ks[2], (C1, C1 + C2, 1, 1), jnp.float32),
        "b1": 0.1 * jax.random.normal(ks[3], (C1,), jnp.float32),
        "g1": 1.0 + 0.1 * jax.random.normal(ks[4], (C1,), jnp.float32),
        "be1": 0.1 * jax.random.normal(ks[5], (C1,), jnp.float32),
        "w2": 0.2 * jax.random.normal(ks[6], (Cout, C1, 3, 3), jnp.float32),
        "b2": 0.1 * jax.random.normal(ks[7], (Cout,), jnp.float32),
        "g2": 1.0 + 0.1 * jax.random.normal(ks[8], (Cout,), jnp.float32),
        "be2": 0.1 * jax.random.normal(ks[9], (Cout,), jnp.float32),
    }

    out = double_conv_with_second_input(x, second, params, **tile_kwargs)
    out = jax.block_until_ready(out)
    assert out.shape == (N, Cout, H, W)

    ref = _reference_forward(x, second, params)
    # bf16 MXU operands for the 3x3 conv widen the gap vs. the f32 reference.
    ok = bool(jnp.allclose(out, ref, atol=3e-2, rtol=3e-2))
    max_err = float(jnp.max(jnp.abs(out - ref)))
    assert ok, f"mismatch vs reference (max abs err = {max_err})"
    return out


if __name__ == "__main__":
    key = jax.random.PRNGKey(0)
    k_a, k_b = jax.random.split(key)

    # Primary small shapes implied by the module.
    _run_case(k_a, N=2, C1=4, C2=3, Cout=8, H=16, W=16)

    # Second config: exercises multi-tile stats grids, lane tiling and the
    # row-tiled finalize pass at toy sizes.
    _run_case(k_b, N=2, C1=8, C2=8, Cout=16, H=32, W=32,
              stats_tile_lanes=512, out_tile_lanes=512, out_tile_rows=16)

    print("KERNEL_OK")
</pallas_src>

<mosaic_0001>
module attributes {stable_mosaic.version = 11 : i64} {
  func.func @_conv1_stats_kernel(%arg0: i32, %arg1: i32, %arg2: memref<1x4x256xf32, #tpu.memory_space<vmem>>, %arg3: memref<1x3x256xf32, #tpu.memory_space<vmem>>, %arg4: memref<16x4xf32, #tpu.memory_space<vmem>>, %arg5: memref<16x3xf32, #tpu.memory_space<vmem>>, %arg6: memref<1x16x1xf32, #tpu.memory_space<vmem>>, %arg7: memref<1x16x1xf32, #tpu.memory_space<vmem>>) attributes {dimension_semantics = [#tpu.dimension_semantics<parallel>, #tpu.dimension_semantics<parallel>], iteration_bounds = array<i64: 2, 1>, scalar_prefetch = 0 : i64, scratch_operands = 0 : i64, tpu.core_type = #tpu.core_type<tc>, window_params = [{transform_indices = @transform_0, window_bounds = array<i64: 1, 4, 256>}, {transform_indices = @transform_1, window_bounds = array<i64: 1, 3, 256>}, {pipeline_mode = #tpu.pipeline_mode<synchronous>, transform_indices = @transform_2, window_bounds = array<i64: 16, 4>}, {pipeline_mode = #tpu.pipeline_mode<synchronous>, transform_indices = @transform_3, window_bounds = array<i64: 16, 3>}, {transform_indices = @transform_4, window_bounds = array<i64: 1, 16, 1>}, {transform_indices = @transform_5, window_bounds = array<i64: 1, 16, 1>}]} {
    %c0 = arith.constant 0 : index
    %c0_0 = arith.constant 0 : index
    %0 = vector.load %arg4[%c0, %c0_0] : memref<16x4xf32, #tpu.memory_space<vmem>>, vector<16x4xf32>
    %c0_1 = arith.constant 0 : index
    %c0_2 = arith.constant 0 : index
    %c0_3 = arith.constant 0 : index
    %1 = vector.load %arg2[%c0_1, %c0_2, %c0_3] : memref<1x4x256xf32, #tpu.memory_space<vmem>>, vector<1x4x256xf32>
    %2 = vector.shape_cast %1 : vector<1x4x256xf32> to vector<4x256xf32>
    %cst = arith.constant dense<0.000000e+00> : vector<16x256xf32>
    %3 = tpu.matmul %0, %2, %cst {dimension_numbers = #tpu.dot_dimension_numbers<[1], [0], [0], [1], [0, 0, 1, 1], [], []>} : vector<16x4xf32>, vector<4x256xf32>, vector<16x256xf32> -> vector<16x256xf32>
    %c0_4 = arith.constant 0 : index
    %c0_5 = arith.constant 0 : index
    %4 = vector.load %arg5[%c0_4, %c0_5] : memref<16x3xf32, #tpu.memory_space<vmem>>, vector<16x3xf32>
    %c0_6 = arith.constant 0 : index
    %c0_7 = arith.constant 0 : index
    %c0_8 = arith.constant 0 : index
    %5 = vector.load %arg3[%c0_6, %c0_7, %c0_8] : memref<1x3x256xf32, #tpu.memory_space<vmem>>, vector<1x3x256xf32>
    %6 = vector.shape_cast %5 : vector<1x3x256xf32> to vector<3x256xf32>
    %cst_9 = arith.constant dense<0.000000e+00> : vector<16x256xf32>
    %7 = tpu.matmul %4, %6, %cst_9 {dimension_numbers = #tpu.dot_dimension_numbers<[1], [0], [0], [1], [0, 0, 1, 1], [], []>} : vector<16x3xf32>, vector<3x256xf32>, vector<16x256xf32> -> vector<16x256xf32>
    %8 = arith.addf %3, %7 : vector<16x256xf32>
    %cst_10 = arith.constant dense<0.000000e+00> : vector<16xf32>
    %9 = vector.multi_reduction <add>, %8, %cst_10 [1] : vector<16x256xf32> to vector<16xf32>
    %10 = vector.shape_cast %9 : vector<16xf32> to vector<16x1xf32>
    %c0_11 = arith.constant 0 : index
    %c0_12 = arith.constant 0 : index
    %c0_13 = arith.constant 0 : index
    %11 = vector.load %arg6[%c0_11, %c0_12, %c0_13] : memref<1x16x1xf32, #tpu.memory_space<vmem>>, vector<1x16x1xf32>
    %12 = vector.shape_cast %11 : vector<1x16x1xf32> to vector<16x1xf32>
    %13 = vector.shape_cast %10 : vector<16x1xf32> to vector<1x16x1xf32>
    tpu.vector_store %arg6[%c0_11, %c0_12, %c0_13], %13 {strides = array<i32>} : memref<1x16x1xf32, #tpu.memory_space<vmem>>, vector<1x16x1xf32>,
    %14 = arith.mulf %8, %8 : vector<16x256xf32>
    %cst_14 = arith.constant dense<0.000000e+00> : vector<16xf32>
    %15 = vector.multi_reduction <add>, %14, %cst_14 [1] : vector<16x256xf32> to vector<16xf32>
    %16 = vector.shape_cast %15 : vector<16xf32> to vector<16x1xf32>
    %c0_15 = arith.constant 0 : index
    %c0_16 = arith.constant 0 : index
    %c0_17 = arith.constant 0 : index
    %17 = vector.load %arg7[%c0_15, %c0_16, %c0_17] : memref<1x16x1xf32, #tpu.memory_space<vmem>>, vector<1x16x1xf32>
    %18 = vector.shape_cast %17 : vector<1x16x1xf32> to vector<16x1xf32>
    %19 = vector.shape_cast %16 : vector<16x1xf32> to vector<1x16x1xf32>
    tpu.vector_store %arg7[%c0_15, %c0_16, %c0_17], %19 {strides = array<i32>} : memref<1x16x1xf32, #tpu.memory_space<vmem>>, vector<1x16x1xf32>,
    return
  }
  func.func @transform_0(%arg0: i32, %arg1: i32) -> (i32, i32, i32) {
    %c0_i32 = arith.constant 0 : i32
    %c0_i32_0 = arith.constant 0 : i32
    return %arg0, %c0_i32, %arg1 : i32, i32, i32
  }
  func.func @transform_1(%arg0: i32, %arg1: i32) -> (i32, i32, i32) {
    %c0_i32 = arith.constant 0 : i32
    %c0_i32_0 = arith.constant 0 : i32
    return %arg0, %c0_i32, %arg1 : i32, i32, i32
  }
  func.func @transform_2(%arg0: i32, %arg1: i32) -> (i32, i32) {
    %c0_i32 = arith.constant 0 : i32
    %c0_i32_0 = arith.constant 0 : i32
    %c0_i32_1 = arith.constant 0 : i32
    return %c0_i32, %c0_i32_0 : i32, i32
  }
  func.func @transform_3(%arg0: i32, %arg1: i32) -> (i32, i32) {
    %c0_i32 = arith.constant 0 : i32
    %c0_i32_0 = arith.constant 0 : i32
    %c0_i32_1 = arith.constant 0 : i32
    return %c0_i32, %c0_i32_0 : i32, i32
  }
  func.func @transform_4(%arg0: i32, %arg1: i32) -> (i32, i32, i32) {
    %c1_i32 = arith.constant 1 : i32
    %0 = arith.muli %arg0, %c1_i32 : i32
    %1 = arith.addi %0, %arg1 : i32
    %c0_i32 = arith.constant 0 : i32
    %c0_i32_0 = arith.constant 0 : i32
    %c0_i32_1 = arith.constant 0 : i32
    return %1, %c0_i32, %c0_i32_0 : i32, i32, i32
  }
  func.func @transform_5(%arg0: i32, %arg1: i32) -> (i32, i32, i32) {
    %c1_i32 = arith.constant 1 : i32
    %0 = arith.muli %arg0, %c1_i32 : i32
    %1 = arith.addi %0, %arg1 : i32
    %c0_i32 = arith.constant 0 : i32
    %c0_i32_0 = arith.constant 0 : i32
    %c0_i32_1 = arith.constant 0 : i32
    return %1, %c0_i32, %c0_i32_0 : i32, i32, i32
  }
}

</mosaic_0001>

<llo_original>
// kernel: tpu_custom_call.1
$region0: #{tpu_custom_call.1}
  #allocation0 [shape = 'u32[]', space=smem, size = 0x4, offset = 0x4, fixed_abs, tag = 'smem constant byte address 0x4 - core index']
  #allocation1 [shape = 'u32[144,128]{1,0:T(1,128)}', space=vmem, size = 0x12000, scoped, tag = 'internal scratch']
  %s0 = inlined_call_operand.vmem [shape: f32[2,4,256], index: 0, kind: input, shape index: {}]
  %s1 = inlined_call_operand.vmem [shape: f32[2,3,256], index: 1, kind: input, shape index: {}]
  %s2 = inlined_call_operand.vmem [shape: f32[16,4], index: 2, kind: input, shape index: {}]
  %s3 = inlined_call_operand.vmem [shape: f32[16,3], index: 3, kind: input, shape index: {}]
  %s4 = inlined_call_operand.vmem [shape: f32[2,16,1], index: 4, kind: output, shape index: {0}]
  %s5 = inlined_call_operand.vmem [shape: f32[2,16,1], index: 5, kind: output, shape index: {1}]
  %6 = xla_tuple %s4, %s5
  %s7 = sld [smem:[#allocation0]]
  $region57: #{tpu_custom_call.1} parent=0
    _
  %s9 = ssub.s32 1, %s7
  %s10 = scalar_select 0, %s9, %s7
  loop: start=0, step=1, limit=4
  $region2: #{tpu_custom_call.1} parent=0 // loop_pre_header
    _
  $region3: #{tpu_custom_call.1} parent=0 // loop_header
    %s12 = sphi 0, %s16
    %p13 = scmp.ge.s32.totalorder %s12, 4
    %s19 = sphi 0, %s31
    %s20 = sphi 0, %s27
    %s21 = sphi 0, %s19
    %s22 = sphi 0, %s20
    %s23 = sphi 0, %s21
    %s24 = sphi 0, %s22
    %s36 = sphi 0, %s38
    %s39 = sphi 0, %s36
    %s40 = sphi 0, %s39
    %s56 = sphi 0, %s40
    %s64 = sphi 0, %s66
    %s67 = sphi 0, %s64
    %s68 = sphi 0, %s67
    %s84 = sphi 0, %s68
    %s88 = sphi 0, %s88
    %s90 = sphi 0, %s88
    %s91 = sphi 0, %s90
    %s105 = sphi 0, %s91
    %s109 = sphi 0, %s109
    %s111 = sphi 0, %s109
    %s112 = sphi 0, %s111
    %s126 = sphi 0, %s112
    %s134 = sphi 0, %s136
    %s137 = sphi 0, %s134
    %s138 = sphi 0, %s137
    %s154 = sphi 0, %s138
    %s162 = sphi 0, %s164
    %s165 = sphi 0, %s162
    %s166 = sphi 0, %s165
    %s182 = sphi 0, %s166
  $region4: #{tpu_custom_call.1} parent=0 // loop_header_branch
    %15 = sbr.rel (%p13) target = $region8
  $region5: #{tpu_custom_call.1} parent=0 // loop_body
    %s17 = ssub.s32 %s12, 1
    %s18 = ssub.s32 %s12, 2
    %s25 = sadd.s32 1, %s20
    %p26 = scmp.ge.s32.totalorder %s25, 1
    %s27 = scalar_select %p26, 0, %s25
    %s28 = sadd.s32 1, %s19
    %s29 = scalar_select %p26, %s28, %s19
    %p30 = scmp.ge.s32.totalorder %s29, 2
    %s31 = scalar_select %p30, 0, %s29
    %s32 = ssub.s32 %s19, %s31
    %s33 = ssub.s32 %s20, %s27
    %s34 = sor.u32 %s32, %s33
    %p35 = scmp.eq.s32.totalorder %s34, 0
    %s37 = sadd.s32 %s36, 1
    %s38 = scalar_select %p35, %s36, %s37
    %p41 = pneg %p35
    %p42 = scmp.eq.s32.totalorder %s12, 1
    %p43 = por %p41, %p42
    %p44 = scmp.ne.s32.totalorder %s36, %s39
    %p45 = scmp.eq.s32.totalorder %s12, 0
    %p46 = por %p44, %p45
    %p47 = scmp.ne.s32.totalorder %s36, %s39
    %p48 = scmp.eq.s32.totalorder %s17, 1
    %p49 = por %p47, %p48
    %p50 = scmp.ne.s32.totalorder %s39, %s40
    %p51 = scmp.eq.s32.totalorder %s17, 0
    %p52 = por %p50, %p51
    %p53 = scmp.ne.s32.totalorder %s39, %s40
    %p54 = scmp.eq.s32.totalorder %s18, 1
    %p55 = por %p53, %p54
    %p57 = scmp.ne.s32.totalorder %s40, %s56
    %p58 = scmp.eq.s32.totalorder %s18, 0
    %p59 = por %p57, %p58
    %s60 = ssub.s32 %s19, %s31
    %s61 = ssub.s32 %s20, %s27
    %s62 = sor.u32 %s60, %s61
    %p63 = scmp.eq.s32.totalorder %s62, 0
    %s65 = sadd.s32 %s64, 1
    %s66 = scalar_select %p63, %s64, %s65
    %p69 = pneg %p63
    %p70 = scmp.eq.s32.totalorder %s12, 1
    %p71 = por %p69, %p70
    %p72 = scmp.ne.s32.totalorder %s64, %s67
    %p73 = scmp.eq.s32.totalorder %s12, 0
    %p74 = por %p72, %p73
    %p75 = scmp.ne.s32.totalorder %s64, %s67
    %p76 = scmp.eq.s32.totalorder %s17, 1
    %p77 = por %p75, %p76
    %p78 = scmp.ne.s32.totalorder %s67, %s68
    %p79 = scmp.eq.s32.totalorder %s17, 0
    %p80 = por %p78, %p79
    %p81 = scmp.ne.s32.totalorder %s67, %s68
    %p82 = scmp.eq.s32.totalorder %s18, 1
    %p83 = por %p81, %p82
    %p85 = scmp.ne.s32.totalorder %s68, %s84
    %p86 = scmp.eq.s32.totalorder %s18, 0
    %p87 = por %p85, %p86
    %s89 = sadd.s32 %s88, 1
    %p92 = scmp.eq.s32.totalorder %s12, 1
    %p93 = scmp.ne.s32.totalorder %s88, %s90
    %p94 = scmp.eq.s32.totalorder %s12, 0
    %p95 = por %p93, %p94
    %p96 = scmp.ne.s32.totalorder %s88, %s90
    %p97 = scmp.eq.s32.totalorder %s17, 1
    %p98 = por %p96, %p97
    %p99 = scmp.ne.s32.totalorder %s90, %s91
    %p100 = scmp.eq.s32.totalorder %s17, 0
    %p101 = por %p99, %p100
    %p102 = scmp.ne.s32.totalorder %s90, %s91
    %p103 = scmp.eq.s32.totalorder %s18, 1
    %p104 = por %p102, %p103
    %p106 = scmp.ne.s32.totalorder %s91, %s105
    %p107 = scmp.eq.s32.totalorder %s18, 0
    %p108 = por %p106, %p107
    %s110 = sadd.s32 %s109, 1
    %p113 = scmp.eq.s32.totalorder %s12, 1
    %p114 = scmp.ne.s32.totalorder %s109, %s111
    %p115 = scmp.eq.s32.totalorder %s12, 0
    %p116 = por %p114, %p115
    %p117 = scmp.ne.s32.totalorder %s109, %s111
    %p118 = scmp.eq.s32.totalorder %s17, 1
    %p119 = por %p117, %p118
    %p120 = scmp.ne.s32.totalorder %s111, %s112
    %p121 = scmp.eq.s32.totalorder %s17, 0
    %p122 = por %p120, %p121
    %p123 = scmp.ne.s32.totalorder %s111, %s112
    %p124 = scmp.eq.s32.totalorder %s18, 1
    %p125 = por %p123, %p124
    %p127 = scmp.ne.s32.totalorder %s112, %s126
    %p128 = scmp.eq.s32.totalorder %s18, 0
    %p129 = por %p127, %p128
    %s130 = sadd.s32 %s19, %s20
    %s131 = sadd.s32 %s31, %s27
    %s132 = ssub.s32 %s130, %s131
    %p133 = scmp.eq.s32.totalorder %s132, 0
    %s135 = sadd.s32 %s134, 1
    %s136 = scalar_select %p133, %s134, %s135
    %p139 = pneg %p133
    %p140 = scmp.eq.s32.totalorder %s12, 1
    %p141 = por %p139, %p140
    %p142 = scmp.ne.s32.totalorder %s134, %s137
    %p143 = scmp.eq.s32.totalorder %s12, 0
    %p144 = por %p142, %p143
    %p145 = scmp.ne.s32.totalorder %s134, %s137
    %p146 = scmp.eq.s32.totalorder %s17, 1
    %p147 = por %p145, %p146
    %p148 = scmp.ne.s32.totalorder %s137, %s138
    %p149 = scmp.eq.s32.totalorder %s17, 0
    %p150 = por %p148, %p149
    %p151 = scmp.ne.s32.totalorder %s137, %s138
    %p152 = scmp.eq.s32.totalorder %s18, 1
    %p153 = por %p151, %p152
    %p155 = scmp.ne.s32.totalorder %s138, %s154
    %p156 = scmp.eq.s32.totalorder %s18, 0
    %p157 = por %p155, %p156
    %s158 = sadd.s32 %s19, %s20
    %s159 = sadd.s32 %s31, %s27
    %s160 = ssub.s32 %s158, %s159
    %p161 = scmp.eq.s32.totalorder %s160, 0
    %s163 = sadd.s32 %s162, 1
    %s164 = scalar_select %p161, %s162, %s163
    %p167 = pneg %p161
    %p168 = scmp.eq.s32.totalorder %s12, 1
    %p169 = por %p167, %p168
    %p170 = scmp.ne.s32.totalorder %s162, %s165
    %p171 = scmp.eq.s32.totalorder %s12, 0
    %p172 = por %p170, %p171
    %p173 = scmp.ne.s32.totalorder %s162, %s165
    %p174 = scmp.eq.s32.totalorder %s17, 1
    %p175 = por %p173, %p174
    %p176 = scmp.ne.s32.totalorder %s165, %s166
    %p177 = scmp.eq.s32.totalorder %s17, 0
    %p178 = por %p176, %p177
    %p179 = scmp.ne.s32.totalorder %s165, %s166
    %p180 = scmp.eq.s32.totalorder %s18, 1
    %p181 = por %p179, %p180
    %p183 = scmp.ne.s32.totalorder %s166, %s182
    %p184 = scmp.eq.s32.totalorder %s18, 0
    %p185 = por %p183, %p184
    %p186 = scmp.le.s32.totalorder 1, %s12
    %p187 = scmp.lt.s32.totalorder %s12, 3
    %p188 = pnand %p186, %p187
    %p189 = pneg %p188
    // Predicated region
    $region9: #{tpu_custom_call.1} parent=5 // pred_check
      _
    $region10: #{tpu_custom_call.1} parent=5 // pred_check_branch
      %191 = sbr.rel (%p188) target = $region12
    $region11: #{tpu_custom_call.1} parent=5 // pred_region
      %s192 = ssub.s32 %s12, 1
      // Predicated region
      $region13: #{tpu_custom_call.1} parent=11 // pred_check
        %p193 = pneg %p101
      $region14: #{tpu_custom_call.1} parent=11 // pred_check_branch
        %195 = sbr.rel (%p193) target = $region16
      $region15: #{tpu_custom_call.1} parent=11 // pred_region
        _
      $region16: #{tpu_custom_call.1} parent=11 // pred_fallthru
        _
      // Predicated region
      $region17: #{tpu_custom_call.1} parent=11 // pred_check
        %p196 = pneg %p122
      $region18: #{tpu_custom_call.1} parent=11 // pred_check_branch
        %198 = sbr.rel (%p196) target = $region20
      $region19: #{tpu_custom_call.1} parent=11 // pred_region
        _
      $region20: #{tpu_custom_call.1} parent=11 // pred_fallthru
        _
    $region12: #{tpu_custom_call.1} parent=5 // pred_fallthru
      _
    %p199 = scmp.lt.s32.totalorder %s12, 2
    // Predicated region
    $region21: #{tpu_custom_call.1} parent=5 // pred_check
      %p200 = pneg %p199
    $region22: #{tpu_custom_call.1} parent=5 // pred_check_branch
      %202 = sbr.rel (%p200) target = $region24
    $region23: #{tpu_custom_call.1} parent=5 // pred_region
      // Predicated region
      $region25: #{tpu_custom_call.1} parent=23 // pred_check
        %p203 = pneg %p46
      $region26: #{tpu_custom_call.1} parent=23 // pred_check_branch
        %205 = sbr.rel (%p203) target = $region28
      $region27: #{tpu_custom_call.1} parent=23 // pred_region
        %s206 = smul.u32 2, %s20
        %p207 = scmp.lt.s32.totalorder %s19, 1
        %s208 = scalar_select %p207, %s19, 1
        %p209 = scmp.lt.s32.totalorder %s206, 1
        %s210 = scalar_select %p209, %s206, 1
        %s211 = smul.addr %s208, 2
        %s212 = sadd.s32 %s210, %s211
        %s213 = smul.addr %s212, 4
        %s214 = scalar_lea.vmem %s0, %s213
        %s215 = smul.u32 2, %s20
      $region28: #{tpu_custom_call.1} parent=23 // pred_fallthru
        _
      // Predicated region
      $region29: #{tpu_custom_call.1} parent=23 // pred_check
        %p216 = pneg %p74
      $region30: #{tpu_custom_call.1} parent=23 // pred_check_branch
        %218 = sbr.rel (%p216) target = $region32
      $region31: #{tpu_custom_call.1} parent=23 // pred_region
        %s219 = smul.u32 2, %s20
        %p220 = scmp.lt.s32.totalorder %s19, 1
        %s221 = scalar_select %p220, %s19, 1
        %p222 = scmp.lt.s32.totalorder %s219, 1
        %s223 = scalar_select %p222, %s219, 1
        %s224 = smul.addr %s221, 2
        %s225 = sadd.s32 %s223, %s224
        %s226 = smul.addr %s225, 4
        %s227 = scalar_lea.vmem %s1, %s226
        %s228 = smul.u32 2, %s20
      $region32: #{tpu_custom_call.1} parent=23 // pred_fallthru
        _
    $region24: #{tpu_custom_call.1} parent=5 // pred_fallthru
      _
    %p229 = scmp.le.s32.totalorder 1, %s12
    %p230 = scmp.lt.s32.totalorder %s12, 3
    %p231 = pnand %p229, %p230
    %p232 = pneg %p231
    // Predicated region
    $region33: #{tpu_custom_call.1} parent=5 // pred_check
      _
    $region34: #{tpu_custom_call.1} parent=5 // pred_check_branch
      %234 = sbr.rel (%p231) target = $region36
    $region35: #{tpu_custom_call.1} parent=5 // pred_region
      %s235 = ssub.s32 %s12, 1
      %s236 = smul.u32 2, %s22
      %p237 = scmp.lt.s32.totalorder %s21, 1
      %s238 = scalar_select %p237, %s21, 1
      %p239 = scmp.lt.s32.totalorder %s236, 1
      %s240 = scalar_select %p239, %s236, 1
      %s241 = smul.addr %s238, 2
      %s242 = sadd.s32 %s240, %s241
      %s243 = smul.addr %s242, 4
      %s244 = scalar_lea.vmem %s0, %s243
      %p245 = pneg %p52
      %p246 = pneg %p49
      %s247 = smul.u32 2, %s22
      %p248 = scmp.lt.s32.totalorder %s21, 1
      %s249 = scalar_select %p248, %s21, 1
      %p250 = scmp.lt.s32.totalorder %s247, 1
      %s251 = scalar_select %p250, %s247, 1
      %s252 = smul.addr %s249, 2
      %s253 = sadd.s32 %s251, %s252
      %s254 = smul.addr %s253, 4
      %s255 = scalar_lea.vmem %s1, %s254
      %p256 = pneg %p80
      %p257 = pneg %p77
      %p258 = pneg %p101
      %p259 = pneg %p98
      %p260 = pneg %p122
      %p261 = pneg %p119
      %p262 = pneg %p150
      %p263 = pneg %p147
      %s264 = sadd.s32 %s21, %s22
      %p265 = scmp.lt.s32.totalorder %s264, 1
      %s266 = scalar_select %p265, %s264, 1
      %s267 = smul.addr %s266, 2
      %s268 = smul.addr %s267, 8
      %s269 = scalar_lea.vmem %s4, %s268
      %p270 = pneg %p178
      %p271 = pneg %p175
      %s272 = sadd.s32 %s21, %s22
      %p273 = scmp.lt.s32.totalorder %s272, 1
      %s274 = scalar_select %p273, %s272, 1
      %s275 = smul.addr %s274, 2
      %s276 = smul.addr %s275, 8
      %s277 = scalar_lea.vmem %s5, %s276
      %s278 = smul.u32 2, %s22
      %p279 = scmp.lt.s32.totalorder %s21, 1
      %s280 = scalar_select %p279, %s21, 1
      %p281 = scmp.lt.s32.totalorder %s278, 1
      %s282 = scalar_select %p281, %s278, 1
      %s283 = smul.addr %s280, 2
      %s284 = sadd.s32 %s282, %s283
      %s285 = smul.addr %s284, 4
      %s286 = scalar_lea.vmem %s0, %s285
      %s287 = smul.u32 2, %s22
      %s288 = smul.u32 2, %s22
      %p289 = scmp.lt.s32.totalorder %s21, 1
      %s290 = scalar_select %p289, %s21, 1
      %p291 = scmp.lt.s32.totalorder %s288, 1
      %s292 = scalar_select %p291, %s288, 1
      %s293 = smul.addr %s290, 2
      %s294 = sadd.s32 %s292, %s293
      %s295 = smul.addr %s294, 4
      %s296 = scalar_lea.vmem %s1, %s295
      %s297 = smul.u32 2, %s22
      %s298 = sadd.s32 %s21, %s22
      %p299 = scmp.lt.s32.totalorder %s298, 1
      %s300 = scalar_select %p299, %s298, 1
      %s301 = smul.addr %s300, 2
      %s302 = smul.addr %s301, 8
      %s303 = scalar_lea.vmem %s4, %s302
      %s304 = sadd.s32 %s21, %s22
      %s305 = sadd.s32 %s21, %s22
      %p306 = scmp.lt.s32.totalorder %s305, 1
      %s307 = scalar_select %p306, %s305, 1
      %s308 = smul.addr %s307, 2
      %s309 = smul.addr %s308, 8
      %s310 = scalar_lea.vmem %s5, %s309
      %s311 = sadd.s32 %s21, %s22
      %v312 = vld [vmem:[%s2] sm:$0xff]
      %v313 = vld [vmem:[%s2 + $0x8] sm:$0xff]
      %v314 = vld [vmem:[%s286] sm:$0xff]
      %v315 = vld [vmem:[%s3] sm:$0xff]
      %v316 = vld [vmem:[%s3 + $0x8] sm:$0xff]
      %v317 = vld [vmem:[%s296] sm:$0x77]
      %v319 = vcombine.high %v317, %v317
      %vm320 = vcmask 23552
      %v322 = vsel %vm320, %v315, 0
      %v325 = vsel %vm320, %v316, 0
      %vm327 = vcmask 1042432
      %v328 = vsel %vm327, %v317, 0
      %v330 = vsel %vm327, %v319, 0
      %332 = vmatprep.subr.mxu0 %v330
      %333 = vmatpush1.msra.mxu0 %v328
      %334 = vmatprep.subr.mxu0 0.0
      %335 = vmatpush1.msra.mxu0 0.0
      %336 = vmatprep.subr.mxu0 0.0
      %337 = vmatpush1.msra.mxu0 0.0
      %338 = vmatprep.subr.mxu0 0.0
      %339 = vmatpush1.msra.mxu0 0.0
      %340 = vmatprep.subr.mxu0 0.0
      %341 = vmatpush1.msra.mxu0 0.0
      %342 = vmatprep.subr.mxu0 0.0
      %343 = vmatpush1.msra.mxu0 0.0
      %344 = vmatprep.subr.mxu0 0.0
      %345 = vmatpush1.msra.mxu0 0.0
      %346 = vmatprep.subr.mxu0 0.0
      %347 = vmatpush1.msra.mxu0 0.0
      %348 = vmatprep.subr.mxu0 0.0
      %349 = vmatpush1.msra.mxu0 0.0
      %350 = vmatprep.subr.mxu0 0.0
      %351 = vmatpush1.msra.mxu0 0.0
      %352 = vmatprep.subr.mxu0 0.0
      %353 = vmatpush1.msra.mxu0 0.0
      %354 = vmatprep.subr.mxu0 0.0
      %355 = vmatpush1.msra.mxu0 0.0
      %356 = vmatprep.subr.mxu0 0.0
      %357 = vmatpush1.msra.mxu0 0.0
      %358 = vmatprep.subr.mxu0 0.0
      %359 = vmatpush1.msra.mxu0 0.0
      %360 = vmatprep.subr.mxu0 0.0
      %361 = vmatpush1.msra.mxu0 0.0
      %362 = vmatprep.subr.mxu0 0.0
      %363 = vmatpush1.msra.mxu0 0.0
      %364 = vmatprep.subr.mxu0 0.0
      %365 = vmatpush1.msra.mxu0 0.0
      %366 = vmatprep.subr.mxu0 0.0
      %367 = vmatpush1.msra.mxu0 0.0
      %368 = vmatprep.subr.mxu0 0.0
      %369 = vmatpush1.msra.mxu0 0.0
      %370 = vmatprep.subr.mxu0 0.0
      %371 = vmatpush1.msra.mxu0 0.0
      %372 = vmatprep.subr.mxu0 0.0
      %373 = vmatpush1.msra.mxu0 0.0
      %374 = vmatprep.subr.mxu0 0.0
      %375 = vmatpush1.msra.mxu0 0.0
      %376 = vmatprep.subr.mxu0 0.0
      %377 = vmatpush1.msra.mxu0 0.0
      %378 = vmatprep.subr.mxu0 0.0
      %379 = vmatpush1.msra.mxu0 0.0
      %380 = vmatprep.subr.mxu0 0.0
      %381 = vmatpush1.msra.mxu0 0.0
      %382 = vmatprep.subr.mxu0 0.0
      %383 = vmatpush1.msra.mxu0 0.0
      %384 = vmatprep.subr.mxu0 0.0
      %385 = vmatpush1.msra.mxu0 0.0
      %386 = vmatprep.subr.mxu0 0.0
      %387 = vmatpush1.msra.mxu0 0.0
      %388 = vmatprep.subr.mxu0 0.0
      %389 = vmatpush1.msra.mxu0 0.0
      %390 = vmatprep.subr.mxu0 0.0
      %391 = vmatpush1.msra.mxu0 0.0
      %392 = vmatprep.subr.mxu0 0.0
      %393 = vmatpush1.msra.mxu0 0.0
      %394 = vmatprep.subr.mxu0 0.0
      %395 = vmatpush1.msra.mxu0 0.0
      %396 = vmatprep.mubr.f32.mxu0 0.0
      %397 = vmatmul.mubr.f32.gmra.mrb[0].mxu0 %v322
      %v398 = vpop.f32.mrb[0].mxu0
      %v399 = vadd.f32 0.0, %v398
      %v400 = vpop.f32.mrb[0].mxu0
      %v401 = vadd.f32 0.0, %v400
      %402 = vmatprep.mubr.f32.mxu0 0.0
      %403 = vmatmul.mubr.f32.gmra.mrb[0].mxu0 %v325
      %v404 = vpop.f32.mrb[0].mxu0
      %v405 = vadd.f32 0.0, %v404
      %v406 = vpop.f32.mrb[0].mxu0
      %v407 = vadd.f32 0.0, %v406
      %408 = vdwg.mxu0
      %v410 = vcombine.high %v314, %v314
      %vm411 = vcmask 31744
      %v413 = vsel %vm411, %v312, 0
      %v416 = vsel %vm411, %v313, 0
      %vm418 = vcmask 1043456
      %v419 = vsel %vm418, %v314, 0
      %v421 = vsel %vm418, %v410, 0
      %423 = vmatprep.subr.mxu0 %v421
      %424 = vmatpush1.msra.mxu0 %v419
      %425 = vmatprep.subr.mxu0 0.0
      %426 = vmatpush1.msra.mxu0 0.0
      %427 = vmatprep.subr.mxu0 0.0
      %428 = vmatpush1.msra.mxu0 0.0
      %429 = vmatprep.subr.mxu0 0.0
      %430 = vmatpush1.msra.mxu0 0.0
      %431 = vmatprep.subr.mxu0 0.0
      %432 = vmatpush1.msra.mxu0 0.0
      %433 = vmatprep.subr.mxu0 0.0
      %434 = vmatpush1.msra.mxu0 0.0
      %435 = vmatprep.subr.mxu0 0.0
      %436 = vmatpush1.msra.mxu0 0.0
      %437 = vmatprep.subr.mxu0 0.0
      %438 = vmatpush1.msra.mxu0 0.0
      %439 = vmatprep.subr.mxu0 0.0
      %440 = vmatpush1.msra.mxu0 0.0
      %441 = vmatprep.subr.mxu0 0.0
      %442 = vmatpush1.msra.mxu0 0.0
      %443 = vmatprep.subr.mxu0 0.0
      %444 = vmatpush1.msra.mxu0 0.0
      %445 = vmatprep.subr.mxu0 0.0
      %446 = vmatpush1.msra.mxu0 0.0
      %447 = vmatprep.subr.mxu0 0.0
      %448 = vmatpush1.msra.mxu0 0.0
      %449 = vmatprep.subr.mxu0 0.0
      %450 = vmatpush1.msra.mxu0 0.0
      %451 = vmatprep.subr.mxu0 0.0
      %452 = vmatpush1.msra.mxu0 0.0
      %453 = vmatprep.subr.mxu0 0.0
      %454 = vmatpush1.msra.mxu0 0.0
      %455 = vmatprep.subr.mxu0 0.0
      %456 = vmatpush1.msra.mxu0 0.0
      %457 = vmatprep.subr.mxu0 0.0
      %458 = vmatpush1.msra.mxu0 0.0
      %459 = vmatprep.subr.mxu0 0.0
      %460 = vmatpush1.msra.mxu0 0.0
      %461 = vmatprep.subr.mxu0 0.0
      %462 = vmatpush1.msra.mxu0 0.0
      %463 = vmatprep.subr.mxu0 0.0
      %464 = vmatpush1.msra.mxu0 0.0
      %465 = vmatprep.subr.mxu0 0.0
      %466 = vmatpush1.msra.mxu0 0.0
      %467 = vmatprep.subr.mxu0 0.0
      %468 = vmatpush1.msra.mxu0 0.0
      %469 = vmatprep.subr.mxu0 0.0
      %470 = vmatpush1.msra.mxu0 0.0
      %471 = vmatprep.subr.mxu0 0.0
      %472 = vmatpush1.msra.mxu0 0.0
      %473 = vmatprep.subr.mxu0 0.0
      %474 = vmatpush1.msra.mxu0 0.0
      %475 = vmatprep.subr.mxu0 0.0
      %476 = vmatpush1.msra.mxu0 0.0
      %477 = vmatprep.subr.mxu0 0.0
      %478 = vmatpush1.msra.mxu0 0.0
      %479 = vmatprep.subr.mxu0 0.0
      %480 = vmatpush1.msra.mxu0 0.0
      %481 = vmatprep.subr.mxu0 0.0
      %482 = vmatpush1.msra.mxu0 0.0
      %483 = vmatprep.subr.mxu0 0.0
      %484 = vmatpush1.msra.mxu0 0.0
      %485 = vmatprep.subr.mxu0 0.0
      %486 = vmatpush1.msra.mxu0 0.0
      %487 = vmatprep.mubr.f32.mxu0 0.0
      %488 = vmatmul.mubr.f32.gmra.mrb[0].mxu0 %v413
      %v489 = vpop.f32.mrb[0].mxu0
      %v490 = vadd.f32 %v399, %v489
      %v491 = vpop.f32.mrb[0].mxu0
      %v492 = vadd.f32 %v401, %v491
      %493 = vmatprep.mubr.f32.mxu0 0.0
      %494 = vmatmul.mubr.f32.gmra.mrb[0].mxu0 %v416
      %v495 = vpop.f32.mrb[0].mxu0
      %v496 = vadd.f32 %v405, %v495
      %v497 = vpop.f32.mrb[0].mxu0
      %v498 = vadd.f32 %v407, %v497
      %499 = vdwg.mxu0
      %v500 = vadd.f32 %v490, %v492
      %501 = vadd.xlane.f32.xlu0 %v500
      %v502 = vpop.xlane.xlu0 %501
      %v503 = vadd.f32 %v496, %v498
      %504 = vadd.xlane.f32.xlu0 %v503
      %v505 = vpop.xlane.xlu0 %504
      %vm506 = vcmask 7168
      %507 = vst.msk [vmem:[%s303] sm:$0xff] %vm506, %v502
      %508 = vst.msk [vmem:[%s303 + $0x8] sm:$0xff] %vm506, %v505
      %v509 = vmul.f32 %v490, %v490
      %v510 = vmul.f32 %v492, %v492
      %v511 = vmul.f32 %v496, %v496
      %v512 = vmul.f32 %v498, %v498
      %v513 = vadd.f32 %v509, %v510
      %514 = vadd.xlane.f32.xlu0 %v513
      %v515 = vpop.xlane.xlu0 %514
      %v516 = vadd.f32 %v511, %v512
      %517 = vadd.xlane.f32.xlu0 %v516
      %v518 = vpop.xlane.xlu0 %517
      %519 = vst.msk [vmem:[%s310] sm:$0xff] %vm506, %v515
      %520 = vst.msk [vmem:[%s310 + $0x8] sm:$0xff] %vm506, %v518
      %s521 = sadd.s32 %s21, %s22
      %p522 = scmp.lt.s32.totalorder %s521, 1
      %s523 = scalar_select %p522, %s521, 1
      %s524 = smul.addr %s523, 2
      %s525 = smul.addr %s524, 8
      %s526 = scalar_lea.vmem %s4, %s525
      %s527 = sadd.s32 %s21, %s22
      %p528 = scmp.lt.s32.totalorder %s527, 1
      %s529 = scalar_select %p528, %s527, 1
      %s530 = smul.addr %s529, 2
      %s531 = smul.addr %s530, 8
      %s532 = scalar_lea.vmem %s5, %s531
      // Predicated region
      $region37: #{tpu_custom_call.1} parent=35 // pred_check
        %p533 = pneg %p147
      $region38: #{tpu_custom_call.1} parent=35 // pred_check_branch
        %535 = sbr.rel (%p533) target = $region40
      $region39: #{tpu_custom_call.1} parent=35 // pred_region
        %s536 = sadd.s32 %s21, %s22
      $region40: #{tpu_custom_call.1} parent=35 // pred_fallthru
        _
      // Predicated region
      $region41: #{tpu_custom_call.1} parent=35 // pred_check
        %p537 = pneg %p175
      $region42: #{tpu_custom_call.1} parent=35 // pred_check_branch
        %539 = sbr.rel (%p537) target = $region44
      $region43: #{tpu_custom_call.1} parent=35 // pred_region
        %s540 = sadd.s32 %s21, %s22
      $region44: #{tpu_custom_call.1} parent=35 // pred_fallthru
        _
    $region36: #{tpu_custom_call.1} parent=5 // pred_fallthru
      _
    %p541 = scmp.le.s32.totalorder 2, %s12
    // Predicated region
    $region45: #{tpu_custom_call.1} parent=5 // pred_check
      %p542 = pneg %p541
    $region46: #{tpu_custom_call.1} parent=5 // pred_check_branch
      %544 = sbr.rel (%p542) target = $region48
    $region47: #{tpu_custom_call.1} parent=5 // pred_region
      %s545 = ssub.s32 %s12, 2
      // Predicated region
      $region49: #{tpu_custom_call.1} parent=47 // pred_check
        %p546 = pneg %p153
      $region50: #{tpu_custom_call.1} parent=47 // pred_check_branch
        %548 = sbr.rel (%p546) target = $region52
      $region51: #{tpu_custom_call.1} parent=47 // pred_region
        %s549 = sadd.s32 %s23, %s24
        %p550 = scmp.lt.s32.totalorder %s549, 1
        %s551 = scalar_select %p550, %s549, 1
        %s552 = smul.addr %s551, 2
        %s553 = smul.addr %s552, 8
        %s554 = scalar_lea.vmem %s4, %s553
      $region52: #{tpu_custom_call.1} parent=47 // pred_fallthru
        _
      // Predicated region
      $region53: #{tpu_custom_call.1} parent=47 // pred_check
        %p555 = pneg %p181
      $region54: #{tpu_custom_call.1} parent=47 // pred_check_branch
        %557 = sbr.rel (%p555) target = $region56
      $region55: #{tpu_custom_call.1} parent=47 // pred_region
        %s558 = sadd.s32 %s23, %s24
        %p559 = scmp.lt.s32.totalorder %s558, 1
        %s560 = scalar_select %p559, %s558, 1
        %s561 = smul.addr %s560, 2
        %s562 = smul.addr %s561, 8
        %s563 = scalar_lea.vmem %s5, %s562
      $region56: #{tpu_custom_call.1} parent=47 // pred_fallthru
        _
    $region48: #{tpu_custom_call.1} parent=5 // pred_fallthru
      _
  $region6: #{tpu_custom_call.1} parent=0 // loop_footer
    %s16 = sadd.s32 1, %s12
  $region7: #{tpu_custom_call.1} parent=0 // loop_footer_branch
    %11 = sbr.rel target = $region3
  $region8: #{tpu_custom_call.1} parent=0 // loop_exit
    _

</llo_original>
